<compile_context>
chip_gen: v5e
topology: v5e:2x2
jax: 0.10.0
libtpu: 0.0.40
codegen_flags: <defaults>
</compile_context>

<pallas_src>
from copy import deepcopy
from functools import partial

import jax
import jax.numpy as jnp
from jax.experimental import pallas as pl
from jax.experimental.pallas import tpu as pltpu


# ---------------------------------------------------------------------------
# Pallas conv2d-as-GEMM kernel: one fused (Cout, Kp) @ (Kp, N*H*W) matmul,
# bias already folded into the K axis.  Single invocation, no grid.
# ---------------------------------------------------------------------------
def _conv2d_gemm_kernel(cols_ref, wt_ref, o_ref):
    # cols_ref : (Kp, N*M)   im2col'd input + ones row + zero pad, Kp = 40
    # wt_ref   : (Cout, Kp)  flattened conv weights + bias column + zero pad
    # o_ref    : (Cout, N*M) lane-dense output (N*M = 512 -> unmasked stores)
    o_ref[...] = jnp.dot(
        wt_ref[...],
        cols_ref[...],
        preferred_element_type=jnp.float32,
        precision=jax.lax.Precision.HIGHEST,
    ).astype(o_ref.dtype)


@partial(jax.jit, static_argnames=("padding",))
def conv2d_pallas(x_nchw, weight, bias, *, padding=1):
    """Conv2d forward equivalent to torch.nn.Conv2d(stride=1, padding=padding).

    x_nchw : (N, Cin, H, W)   float32
    weight : (Cout, Cin, KH, KW)
    bias   : (Cout,)
    returns (N, Cout, H, W)
    """
    N, Cin, H, W = x_nchw.shape
    Cout, _, KH, KW = weight.shape
    K = Cin * KH * KW                 # 36
    M = H * W                         # 256
    NM = N * M                        # 512 (4 x 128 -> lane-dense)
    Kp = ((K + 1 + 7) // 8) * 8       # bias row folded in, rounded to 8 -> 40
    dt = x_nchw.dtype

    # --- Layout glue (plain XLA, fuses inside this jit) -----------------------
    # Spatial zero-pad + im2col, K-ordering (ci, kh, kw) to match
    # weight.reshape(Cout, K).
    xp = jnp.pad(x_nchw, ((0, 0), (0, 0), (padding, padding), (padding, padding)))
    cols = jnp.stack(
        [xp[:, :, kh:kh + H, kw:kw + W] for kh in range(KH) for kw in range(KW)],
        axis=2,
    )                                               # (N, Cin, KH*KW, H, W)
    cols = cols.reshape(N, K, M)                    # (N, 36, 256)
    # Fold batch into the lane (M) axis: column index = n*M + m.
    cols = cols.transpose(1, 0, 2).reshape(K, NM)   # (36, 512)
    # Fold bias into K (ones row) and zero-pad K up to Kp.
    cols_aug = jnp.concatenate(
        [cols, jnp.ones((1, NM), dt), jnp.zeros((Kp - K - 1, NM), dt)], axis=0
    )                                               # (40, 512)
    wt_aug = jnp.concatenate(
        [weight.reshape(Cout, K), bias.reshape(Cout, 1),
         jnp.zeros((Cout, Kp - K - 1), dt)], axis=1
    )                                               # (8, 40)

    # --- Single-step Pallas GEMM ----------------------------------------------
    out = pl.pallas_call(
        _conv2d_gemm_kernel,
        out_shape=jax.ShapeDtypeStruct((Cout, NM), dt),
        in_specs=[
            pl.BlockSpec(memory_space=pltpu.MemorySpace.VMEM),
            pl.BlockSpec(memory_space=pltpu.MemorySpace.VMEM),
        ],
        out_specs=pl.BlockSpec(memory_space=pltpu.MemorySpace.VMEM),
    )(cols_aug, wt_aug)

    # (Cout, N*M) -> (N, Cout, H, W); tiny (16 KiB) XLA transpose.
    return jnp.transpose(out.reshape(Cout, N, H, W), (1, 0, 2, 3))


# ---------------------------------------------------------------------------
# The wrapped "layer": Conv2d params + Pallas forward
# ---------------------------------------------------------------------------
class Conv2dLayer:
    def __init__(self, params, padding=1):
        self.params = params        # dict: {"weight": (Cout,Cin,KH,KW), "bias": (Cout,)}
        self.padding = padding

    def forward(self, x):
        return conv2d_pallas(x, self.params["weight"], self.params["bias"],
                             padding=self.padding)

    def __call__(self, x):
        return self.forward(x)


# ---------------------------------------------------------------------------
# TaskSpecificLayer — same semantics as the PyTorch module
# ---------------------------------------------------------------------------
class TaskSpecificLayer:
    def __init__(self, layer):
        self.task_modules = {}
        self.active_task = ''
        self.original_layer = layer

    def create_layer_for_task(self, task_id: str) -> None:
        if task_id not in self.task_modules:
            self.task_modules[task_id] = deepcopy(self.original_layer)
        else:
            raise Exception(f'Task {task_id} already known to this task-specific layer')

    def set_active_task(self, task_id: str):
        self.active_task = task_id

    def forward(self, *args, **kwargs):
        if self.active_task in self.task_modules:
            return self.task_modules[self.active_task].forward(*args, **kwargs)
        else:
            if self.active_task != 'original':
                raise Exception(
                    f'Using forward pass of original layer in {self}. '
                    f'Because of unknown active task {self.active_task}'
                    f"To suppress this warning set activate task to 'original'")
            return self.original_layer(*args, **kwargs)

    def __call__(self, *args, **kwargs):
        return self.forward(*args, **kwargs)


# ---------------------------------------------------------------------------
# Main
# ---------------------------------------------------------------------------
if __name__ == "__main__":
    key = jax.random.PRNGKey(0)
    k_x, k_w, k_b = jax.random.split(key, 3)

    N, Cin, H, W = 2, 4, 16, 16
    Cout, KH, KW = 8, 3, 3

    x = jax.random.normal(k_x, (N, Cin, H, W), dtype=jnp.float32)
    weight = jax.random.normal(k_w, (Cout, Cin, KH, KW), dtype=jnp.float32) * 0.1
    bias = jax.random.normal(k_b, (Cout,), dtype=jnp.float32) * 0.1

    original = Conv2dLayer({"weight": weight, "bias": bias}, padding=1)
    tsl = TaskSpecificLayer(original)

    # Exercise the task-specific path (deepcopied layer for task "taskA").
    tsl.create_layer_for_task("taskA")
    tsl.set_active_task("taskA")
    out_task = jax.block_until_ready(tsl(x))

    # Exercise the 'original' fallback path as well.
    tsl.set_active_task("original")
    out_orig = jax.block_until_ready(tsl(x))

    # Correctness check against XLA's conv (same NCHW semantics as PyTorch),
    # with matmul precision pinned on both sides.
    ref = jax.lax.conv_general_dilated(
        x, weight, window_strides=(1, 1), padding=((1, 1), (1, 1)),
        dimension_numbers=("NCHW", "OIHW", "NCHW"),
        precision=jax.lax.Precision.HIGHEST,
    ) + bias.reshape(1, Cout, 1, 1)
    assert out_task.shape == (N, Cout, H, W)
    assert jnp.allclose(out_task, ref, atol=1e-4, rtol=1e-4)
    assert jnp.allclose(out_orig, ref, atol=1e-4, rtol=1e-4)

    print("KERNEL_OK")
</pallas_src>

<mosaic_0001>
module attributes {stable_mosaic.version = 11 : i64} {
  func.func @_conv2d_gemm_kernel(%arg0: memref<40x512xf32, #tpu.memory_space<vmem>>, %arg1: memref<8x40xf32, #tpu.memory_space<vmem>>, %arg2: memref<8x512xf32, #tpu.memory_space<vmem>>) attributes {dimension_semantics = [], scalar_prefetch = 0 : i64, scratch_operands = 0 : i64, tpu.core_type = #tpu.core_type<tc>} {
    %c0 = arith.constant 0 : index
    %c0_0 = arith.constant 0 : index
    %0 = vector.load %arg1[%c0, %c0_0] : memref<8x40xf32, #tpu.memory_space<vmem>>, vector<8x40xf32>
    %c0_1 = arith.constant 0 : index
    %c0_2 = arith.constant 0 : index
    %1 = vector.load %arg0[%c0_1, %c0_2] : memref<40x512xf32, #tpu.memory_space<vmem>>, vector<40x512xf32>
    %cst = arith.constant dense<0.000000e+00> : vector<8x512xf32>
    %2 = tpu.matmul %0, %1, %cst {dimension_numbers = #tpu.dot_dimension_numbers<[1], [0], [0], [1], [0, 0, 1, 1], [], []>, precision = #tpu.contract_precision<fp32>} : vector<8x40xf32>, vector<40x512xf32>, vector<8x512xf32> -> vector<8x512xf32>
    %c0_3 = arith.constant 0 : index
    %c0_4 = arith.constant 0 : index
    %3 = vector.load %arg2[%c0_3, %c0_4] : memref<8x512xf32, #tpu.memory_space<vmem>>, vector<8x512xf32>
    tpu.vector_store %arg2[%c0_3, %c0_4], %2 {strides = array<i32>} : memref<8x512xf32, #tpu.memory_space<vmem>>, vector<8x512xf32>,
    return
  }
}

</mosaic_0001>

<llo_original>
// kernel: conv2d_pallas.1
$region0: #{conv2d_pallas.1}
  #allocation0 [shape = 'u32[]', space=smem, size = 0x4, offset = 0x4, fixed_abs, tag = 'smem constant byte address 0x4 - core index']
  #allocation1 [shape = 'u32[72,128]{1,0:T(1,128)}', space=vmem, size = 0x9000, scoped, tag = 'internal scratch']
  %s0 = inlined_call_operand.vmem [shape: f32[40,512], index: 0, kind: input, shape index: {}]
  %s1 = inlined_call_operand.vmem [shape: f32[8,40], index: 1, kind: input, shape index: {}]
  %s2 = inlined_call_operand.vmem [shape: f32[8,512], index: 2, kind: output, shape index: {}]
  %s3 = sld [smem:[#allocation0]]
  $region18: #{conv2d_pallas.1} parent=0
    _
  %s5 = ssub.s32 1, %s3
  %s6 = scalar_select 0, %s5, %s3
  // Predicated region
  $region2: #{conv2d_pallas.1} parent=0 // pred_check
    _
  $region3: #{conv2d_pallas.1} parent=0 // pred_check_branch
    %8 = sbr.rel (0) target = $region5
  $region4: #{conv2d_pallas.1} parent=0 // pred_region
    _
  $region5: #{conv2d_pallas.1} parent=0 // pred_fallthru
    _
  // Predicated region
  $region6: #{conv2d_pallas.1} parent=0 // pred_check
    _
  $region7: #{conv2d_pallas.1} parent=0 // pred_check_branch
    %10 = sbr.rel (0) target = $region9
  $region8: #{conv2d_pallas.1} parent=0 // pred_region
    _
  $region9: #{conv2d_pallas.1} parent=0 // pred_fallthru
    _
  %v11 = vld [vmem:[%s1] sm:$0xff]
  %v12 = vld [vmem:[%s0] sm:$0xff]
  %v13 = vld [vmem:[%s0 + $0x8] sm:$0xff]
  %v14 = vld [vmem:[%s0 + $0x10] sm:$0xff]
  %v15 = vld [vmem:[%s0 + $0x18] sm:$0xff]
  %v16 = vld [vmem:[%s0 + $0x20] sm:$0xff]
  %v17 = vld [vmem:[%s0 + $0x28] sm:$0xff]
  %v18 = vld [vmem:[%s0 + $0x30] sm:$0xff]
  %v19 = vld [vmem:[%s0 + $0x38] sm:$0xff]
  %v20 = vld [vmem:[%s0 + $0x40] sm:$0xff]
  %v21 = vld [vmem:[%s0 + $0x48] sm:$0xff]
  %v22 = vld [vmem:[%s0 + $0x50] sm:$0xff]
  %v23 = vld [vmem:[%s0 + $0x58] sm:$0xff]
  %v24 = vld [vmem:[%s0 + $0x60] sm:$0xff]
  %v25 = vld [vmem:[%s0 + $0x68] sm:$0xff]
  %v26 = vld [vmem:[%s0 + $0x70] sm:$0xff]
  %v27 = vld [vmem:[%s0 + $0x78] sm:$0xff]
  %v28 = vld [vmem:[%s0 + $0x80] sm:$0xff]
  %v29 = vld [vmem:[%s0 + $0x88] sm:$0xff]
  %v30 = vld [vmem:[%s0 + $0x90] sm:$0xff]
  %v31 = vld [vmem:[%s0 + $0x98] sm:$0xff]
  %vm32 = vcmask 326656
  %v34 = vsel %vm32, %v11, 0
  %36 = vmatpush.msra.mxu0 0.0
  %37 = vmatpush.msra.mxu0 0.0
  %38 = vmatpush.msra.mxu0 0.0
  %39 = vmatpush.msra.mxu0 0.0
  %40 = vmatpush.msra.mxu0 0.0
  %41 = vmatpush.msra.mxu0 0.0
  %42 = vmatpush.msra.mxu0 0.0
  %43 = vmatpush.msra.mxu0 0.0
  %44 = vmatpush.msra.mxu0 0.0
  %45 = vmatpush.msra.mxu0 0.0
  %46 = vmatpush.msra.mxu0 0.0
  %v47 = vand.u32 %v28, 4294901760
  %48 = vmatpush.msra.mxu0 %v47
  %v49 = vand.u32 %v24, 4294901760
  %50 = vmatpush.msra.mxu0 %v49
  %v51 = vand.u32 %v20, 4294901760
  %52 = vmatpush.msra.mxu0 %v51
  %v53 = vand.u32 %v16, 4294901760
  %54 = vmatpush.msra.mxu0 %v53
  %v55 = vand.u32 %v12, 4294901760
  %56 = vmatpush.msra.mxu0 %v55
  %v57 = vand.u32 %v34, 4294901760
  %v58 = vsub.f32 %v34, %v57
  %v59 = vand.u32 %v58, 4294901760
  %v60 = vsub.f32 %v58, %v59
  %v61 = vand.u32 %v60, 4294901760
  %62 = vmatmul.f32.gmra.mxu0 %v61
  %v63 = vpop.f32.mrf.mxu0
  %v64 = vadd.f32 0.0, %v63
  %65 = vdwg.mxu0
  %66 = vmatpush.msra.mxu0 0.0
  %67 = vmatpush.msra.mxu0 0.0
  %68 = vmatpush.msra.mxu0 0.0
  %69 = vmatpush.msra.mxu0 0.0
  %70 = vmatpush.msra.mxu0 0.0
  %71 = vmatpush.msra.mxu0 0.0
  %72 = vmatpush.msra.mxu0 0.0
  %73 = vmatpush.msra.mxu0 0.0
  %74 = vmatpush.msra.mxu0 0.0
  %75 = vmatpush.msra.mxu0 0.0
  %76 = vmatpush.msra.mxu0 0.0
  %v77 = vand.u32 %v28, 4294901760
  %v78 = vsub.f32 %v28, %v77
  %v79 = vand.u32 %v78, 4294901760
  %v80 = vsub.f32 %v78, %v79
  %v81 = vand.u32 %v80, 4294901760
  %82 = vmatpush.msra.mxu0 %v81
  %v83 = vand.u32 %v24, 4294901760
  %v84 = vsub.f32 %v24, %v83
  %v85 = vand.u32 %v84, 4294901760
  %v86 = vsub.f32 %v84, %v85
  %v87 = vand.u32 %v86, 4294901760
  %88 = vmatpush.msra.mxu0 %v87
  %v89 = vand.u32 %v20, 4294901760
  %v90 = vsub.f32 %v20, %v89
  %v91 = vand.u32 %v90, 4294901760
  %v92 = vsub.f32 %v90, %v91
  %v93 = vand.u32 %v92, 4294901760
  %94 = vmatpush.msra.mxu0 %v93
  %v95 = vand.u32 %v16, 4294901760
  %v96 = vsub.f32 %v16, %v95
  %v97 = vand.u32 %v96, 4294901760
  %v98 = vsub.f32 %v96, %v97
  %v99 = vand.u32 %v98, 4294901760
  %100 = vmatpush.msra.mxu0 %v99
  %v101 = vand.u32 %v12, 4294901760
  %v102 = vsub.f32 %v12, %v101
  %v103 = vand.u32 %v102, 4294901760
  %v104 = vsub.f32 %v102, %v103
  %v105 = vand.u32 %v104, 4294901760
  %106 = vmatpush.msra.mxu0 %v105
  %v107 = vand.u32 %v34, 4294901760
  %108 = vmatmul.f32.gmra.mxu0 %v107
  %v109 = vpop.f32.mrf.mxu0
  %v110 = vadd.f32 %v64, %v109
  %111 = vdwg.mxu0
  %112 = vmatpush.msra.mxu0 0.0
  %113 = vmatpush.msra.mxu0 0.0
  %114 = vmatpush.msra.mxu0 0.0
  %115 = vmatpush.msra.mxu0 0.0
  %116 = vmatpush.msra.mxu0 0.0
  %117 = vmatpush.msra.mxu0 0.0
  %118 = vmatpush.msra.mxu0 0.0
  %119 = vmatpush.msra.mxu0 0.0
  %120 = vmatpush.msra.mxu0 0.0
  %121 = vmatpush.msra.mxu0 0.0
  %122 = vmatpush.msra.mxu0 0.0
  %v123 = vand.u32 %v28, 4294901760
  %v124 = vsub.f32 %v28, %v123
  %125 = vmatpush.msra.mxu0 %v124
  %v126 = vand.u32 %v24, 4294901760
  %v127 = vsub.f32 %v24, %v126
  %128 = vmatpush.msra.mxu0 %v127
  %v129 = vand.u32 %v20, 4294901760
  %v130 = vsub.f32 %v20, %v129
  %131 = vmatpush.msra.mxu0 %v130
  %v132 = vand.u32 %v16, 4294901760
  %v133 = vsub.f32 %v16, %v132
  %134 = vmatpush.msra.mxu0 %v133
  %v135 = vand.u32 %v12, 4294901760
  %v136 = vsub.f32 %v12, %v135
  %137 = vmatpush.msra.mxu0 %v136
  %v138 = vand.u32 %v34, 4294901760
  %v139 = vsub.f32 %v34, %v138
  %140 = vmatmul.f32.gmra.mxu0 %v139
  %v141 = vpop.f32.mrf.mxu0
  %v142 = vadd.f32 %v110, %v141
  %143 = vdwg.mxu0
  %144 = vmatpush.msra.mxu0 0.0
  %145 = vmatpush.msra.mxu0 0.0
  %146 = vmatpush.msra.mxu0 0.0
  %147 = vmatpush.msra.mxu0 0.0
  %148 = vmatpush.msra.mxu0 0.0
  %149 = vmatpush.msra.mxu0 0.0
  %150 = vmatpush.msra.mxu0 0.0
  %151 = vmatpush.msra.mxu0 0.0
  %152 = vmatpush.msra.mxu0 0.0
  %153 = vmatpush.msra.mxu0 0.0
  %154 = vmatpush.msra.mxu0 0.0
  %v155 = vand.u32 %v28, 4294901760
  %156 = vmatpush.msra.mxu0 %v155
  %v157 = vand.u32 %v24, 4294901760
  %158 = vmatpush.msra.mxu0 %v157
  %v159 = vand.u32 %v20, 4294901760
  %160 = vmatpush.msra.mxu0 %v159
  %v161 = vand.u32 %v16, 4294901760
  %162 = vmatpush.msra.mxu0 %v161
  %v163 = vand.u32 %v12, 4294901760
  %164 = vmatpush.msra.mxu0 %v163
  %v165 = vand.u32 %v34, 4294901760
  %v166 = vsub.f32 %v34, %v165
  %v167 = vand.u32 %v166, 4294901760
  %168 = vmatmul.f32.gmra.mxu0 %v167
  %v169 = vpop.f32.mrf.mxu0
  %v170 = vadd.f32 %v142, %v169
  %171 = vdwg.mxu0
  %172 = vmatpush.msra.mxu0 0.0
  %173 = vmatpush.msra.mxu0 0.0
  %174 = vmatpush.msra.mxu0 0.0
  %175 = vmatpush.msra.mxu0 0.0
  %176 = vmatpush.msra.mxu0 0.0
  %177 = vmatpush.msra.mxu0 0.0
  %178 = vmatpush.msra.mxu0 0.0
  %179 = vmatpush.msra.mxu0 0.0
  %180 = vmatpush.msra.mxu0 0.0
  %181 = vmatpush.msra.mxu0 0.0
  %182 = vmatpush.msra.mxu0 0.0
  %v183 = vand.u32 %v28, 4294901760
  %v184 = vsub.f32 %v28, %v183
  %v185 = vand.u32 %v184, 4294901760
  %186 = vmatpush.msra.mxu0 %v185
  %v187 = vand.u32 %v24, 4294901760
  %v188 = vsub.f32 %v24, %v187
  %v189 = vand.u32 %v188, 4294901760
  %190 = vmatpush.msra.mxu0 %v189
  %v191 = vand.u32 %v20, 4294901760
  %v192 = vsub.f32 %v20, %v191
  %v193 = vand.u32 %v192, 4294901760
  %194 = vmatpush.msra.mxu0 %v193
  %v195 = vand.u32 %v16, 4294901760
  %v196 = vsub.f32 %v16, %v195
  %v197 = vand.u32 %v196, 4294901760
  %198 = vmatpush.msra.mxu0 %v197
  %v199 = vand.u32 %v12, 4294901760
  %v200 = vsub.f32 %v12, %v199
  %v201 = vand.u32 %v200, 4294901760
  %202 = vmatpush.msra.mxu0 %v201
  %v203 = vand.u32 %v34, 4294901760
  %204 = vmatmul.f32.gmra.mxu0 %v203
  %v205 = vpop.f32.mrf.mxu0
  %v206 = vadd.f32 %v170, %v205
  %207 = vdwg.mxu0
  %208 = vmatpush.msra.mxu0 0.0
  %209 = vmatpush.msra.mxu0 0.0
  %210 = vmatpush.msra.mxu0 0.0
  %211 = vmatpush.msra.mxu0 0.0
  %212 = vmatpush.msra.mxu0 0.0
  %213 = vmatpush.msra.mxu0 0.0
  %214 = vmatpush.msra.mxu0 0.0
  %215 = vmatpush.msra.mxu0 0.0
  %216 = vmatpush.msra.mxu0 0.0
  %217 = vmatpush.msra.mxu0 0.0
  %218 = vmatpush.msra.mxu0 0.0
  %v219 = vand.u32 %v28, 4294901760
  %220 = vmatpush.msra.mxu0 %v219
  %v221 = vand.u32 %v24, 4294901760
  %222 = vmatpush.msra.mxu0 %v221
  %v223 = vand.u32 %v20, 4294901760
  %224 = vmatpush.msra.mxu0 %v223
  %v225 = vand.u32 %v16, 4294901760
  %226 = vmatpush.msra.mxu0 %v225
  %v227 = vand.u32 %v12, 4294901760
  %228 = vmatpush.msra.mxu0 %v227
  %v229 = vand.u32 %v34, 4294901760
  %230 = vmatmul.f32.gmra.mxu0 %v229
  %v231 = vpop.f32.mrf.mxu0
  %v232 = vadd.f32 %v206, %v231
  %233 = vdwg.mxu0
  %234 = vmatpush.msra.mxu0 0.0
  %235 = vmatpush.msra.mxu0 0.0
  %236 = vmatpush.msra.mxu0 0.0
  %237 = vmatpush.msra.mxu0 0.0
  %238 = vmatpush.msra.mxu0 0.0
  %239 = vmatpush.msra.mxu0 0.0
  %240 = vmatpush.msra.mxu0 0.0
  %241 = vmatpush.msra.mxu0 0.0
  %242 = vmatpush.msra.mxu0 0.0
  %243 = vmatpush.msra.mxu0 0.0
  %244 = vmatpush.msra.mxu0 0.0
  %v245 = vand.u32 %v29, 4294901760
  %246 = vmatpush.msra.mxu0 %v245
  %v247 = vand.u32 %v25, 4294901760
  %248 = vmatpush.msra.mxu0 %v247
  %v249 = vand.u32 %v21, 4294901760
  %250 = vmatpush.msra.mxu0 %v249
  %v251 = vand.u32 %v17, 4294901760
  %252 = vmatpush.msra.mxu0 %v251
  %v253 = vand.u32 %v13, 4294901760
  %254 = vmatpush.msra.mxu0 %v253
  %v255 = vand.u32 %v34, 4294901760
  %v256 = vsub.f32 %v34, %v255
  %v257 = vand.u32 %v256, 4294901760
  %v258 = vsub.f32 %v256, %v257
  %v259 = vand.u32 %v258, 4294901760
  %260 = vmatmul.f32.gmra.mxu0 %v259
  %v261 = vpop.f32.mrf.mxu0
  %v262 = vadd.f32 0.0, %v261
  %263 = vdwg.mxu0
  %264 = vmatpush.msra.mxu0 0.0
  %265 = vmatpush.msra.mxu0 0.0
  %266 = vmatpush.msra.mxu0 0.0
  %267 = vmatpush.msra.mxu0 0.0
  %268 = vmatpush.msra.mxu0 0.0
  %269 = vmatpush.msra.mxu0 0.0
  %270 = vmatpush.msra.mxu0 0.0
  %271 = vmatpush.msra.mxu0 0.0
  %272 = vmatpush.msra.mxu0 0.0
  %273 = vmatpush.msra.mxu0 0.0
  %274 = vmatpush.msra.mxu0 0.0
  %v275 = vand.u32 %v29, 4294901760
  %v276 = vsub.f32 %v29, %v275
  %v277 = vand.u32 %v276, 4294901760
  %v278 = vsub.f32 %v276, %v277
  %v279 = vand.u32 %v278, 4294901760
  %280 = vmatpush.msra.mxu0 %v279
  %v281 = vand.u32 %v25, 4294901760
  %v282 = vsub.f32 %v25, %v281
  %v283 = vand.u32 %v282, 4294901760
  %v284 = vsub.f32 %v282, %v283
  %v285 = vand.u32 %v284, 4294901760
  %286 = vmatpush.msra.mxu0 %v285
  %v287 = vand.u32 %v21, 4294901760
  %v288 = vsub.f32 %v21, %v287
  %v289 = vand.u32 %v288, 4294901760
  %v290 = vsub.f32 %v288, %v289
  %v291 = vand.u32 %v290, 4294901760
  %292 = vmatpush.msra.mxu0 %v291
  %v293 = vand.u32 %v17, 4294901760
  %v294 = vsub.f32 %v17, %v293
  %v295 = vand.u32 %v294, 4294901760
  %v296 = vsub.f32 %v294, %v295
  %v297 = vand.u32 %v296, 4294901760
  %298 = vmatpush.msra.mxu0 %v297
  %v299 = vand.u32 %v13, 4294901760
  %v300 = vsub.f32 %v13, %v299
  %v301 = vand.u32 %v300, 4294901760
  %v302 = vsub.f32 %v300, %v301
  %v303 = vand.u32 %v302, 4294901760
  %304 = vmatpush.msra.mxu0 %v303
  %v305 = vand.u32 %v34, 4294901760
  %306 = vmatmul.f32.gmra.mxu0 %v305
  %v307 = vpop.f32.mrf.mxu0
  %v308 = vadd.f32 %v262, %v307
  %309 = vdwg.mxu0
  %310 = vmatpush.msra.mxu0 0.0
  %311 = vmatpush.msra.mxu0 0.0
  %312 = vmatpush.msra.mxu0 0.0
  %313 = vmatpush.msra.mxu0 0.0
  %314 = vmatpush.msra.mxu0 0.0
  %315 = vmatpush.msra.mxu0 0.0
  %316 = vmatpush.msra.mxu0 0.0
  %317 = vmatpush.msra.mxu0 0.0
  %318 = vmatpush.msra.mxu0 0.0
  %319 = vmatpush.msra.mxu0 0.0
  %320 = vmatpush.msra.mxu0 0.0
  %v321 = vand.u32 %v29, 4294901760
  %v322 = vsub.f32 %v29, %v321
  %323 = vmatpush.msra.mxu0 %v322
  %v324 = vand.u32 %v25, 4294901760
  %v325 = vsub.f32 %v25, %v324
  %326 = vmatpush.msra.mxu0 %v325
  %v327 = vand.u32 %v21, 4294901760
  %v328 = vsub.f32 %v21, %v327
  %329 = vmatpush.msra.mxu0 %v328
  %v330 = vand.u32 %v17, 4294901760
  %v331 = vsub.f32 %v17, %v330
  %332 = vmatpush.msra.mxu0 %v331
  %v333 = vand.u32 %v13, 4294901760
  %v334 = vsub.f32 %v13, %v333
  %335 = vmatpush.msra.mxu0 %v334
  %v336 = vand.u32 %v34, 4294901760
  %v337 = vsub.f32 %v34, %v336
  %338 = vmatmul.f32.gmra.mxu0 %v337
  %v339 = vpop.f32.mrf.mxu0
  %v340 = vadd.f32 %v308, %v339
  %341 = vdwg.mxu0
  %342 = vmatpush.msra.mxu0 0.0
  %343 = vmatpush.msra.mxu0 0.0
  %344 = vmatpush.msra.mxu0 0.0
  %345 = vmatpush.msra.mxu0 0.0
  %346 = vmatpush.msra.mxu0 0.0
  %347 = vmatpush.msra.mxu0 0.0
  %348 = vmatpush.msra.mxu0 0.0
  %349 = vmatpush.msra.mxu0 0.0
  %350 = vmatpush.msra.mxu0 0.0
  %351 = vmatpush.msra.mxu0 0.0
  %352 = vmatpush.msra.mxu0 0.0
  %v353 = vand.u32 %v29, 4294901760
  %354 = vmatpush.msra.mxu0 %v353
  %v355 = vand.u32 %v25, 4294901760
  %356 = vmatpush.msra.mxu0 %v355
  %v357 = vand.u32 %v21, 4294901760
  %358 = vmatpush.msra.mxu0 %v357
  %v359 = vand.u32 %v17, 4294901760
  %360 = vmatpush.msra.mxu0 %v359
  %v361 = vand.u32 %v13, 4294901760
  %362 = vmatpush.msra.mxu0 %v361
  %v363 = vand.u32 %v34, 4294901760
  %v364 = vsub.f32 %v34, %v363
  %v365 = vand.u32 %v364, 4294901760
  %366 = vmatmul.f32.gmra.mxu0 %v365
  %v367 = vpop.f32.mrf.mxu0
  %v368 = vadd.f32 %v340, %v367
  %369 = vdwg.mxu0
  %370 = vmatpush.msra.mxu0 0.0
  %371 = vmatpush.msra.mxu0 0.0
  %372 = vmatpush.msra.mxu0 0.0
  %373 = vmatpush.msra.mxu0 0.0
  %374 = vmatpush.msra.mxu0 0.0
  %375 = vmatpush.msra.mxu0 0.0
  %376 = vmatpush.msra.mxu0 0.0
  %377 = vmatpush.msra.mxu0 0.0
  %378 = vmatpush.msra.mxu0 0.0
  %379 = vmatpush.msra.mxu0 0.0
  %380 = vmatpush.msra.mxu0 0.0
  %v381 = vand.u32 %v29, 4294901760
  %v382 = vsub.f32 %v29, %v381
  %v383 = vand.u32 %v382, 4294901760
  %384 = vmatpush.msra.mxu0 %v383
  %v385 = vand.u32 %v25, 4294901760
  %v386 = vsub.f32 %v25, %v385
  %v387 = vand.u32 %v386, 4294901760
  %388 = vmatpush.msra.mxu0 %v387
  %v389 = vand.u32 %v21, 4294901760
  %v390 = vsub.f32 %v21, %v389
  %v391 = vand.u32 %v390, 4294901760
  %392 = vmatpush.msra.mxu0 %v391
  %v393 = vand.u32 %v17, 4294901760
  %v394 = vsub.f32 %v17, %v393
  %v395 = vand.u32 %v394, 4294901760
  %396 = vmatpush.msra.mxu0 %v395
  %v397 = vand.u32 %v13, 4294901760
  %v398 = vsub.f32 %v13, %v397
  %v399 = vand.u32 %v398, 4294901760
  %400 = vmatpush.msra.mxu0 %v399
  %v401 = vand.u32 %v34, 4294901760
  %402 = vmatmul.f32.gmra.mxu0 %v401
  %v403 = vpop.f32.mrf.mxu0
  %v404 = vadd.f32 %v368, %v403
  %405 = vdwg.mxu0
  %406 = vmatpush.msra.mxu0 0.0
  %407 = vmatpush.msra.mxu0 0.0
  %408 = vmatpush.msra.mxu0 0.0
  %409 = vmatpush.msra.mxu0 0.0
  %410 = vmatpush.msra.mxu0 0.0
  %411 = vmatpush.msra.mxu0 0.0
  %412 = vmatpush.msra.mxu0 0.0
  %413 = vmatpush.msra.mxu0 0.0
  %414 = vmatpush.msra.mxu0 0.0
  %415 = vmatpush.msra.mxu0 0.0
  %416 = vmatpush.msra.mxu0 0.0
  %v417 = vand.u32 %v29, 4294901760
  %418 = vmatpush.msra.mxu0 %v417
  %v419 = vand.u32 %v25, 4294901760
  %420 = vmatpush.msra.mxu0 %v419
  %v421 = vand.u32 %v21, 4294901760
  %422 = vmatpush.msra.mxu0 %v421
  %v423 = vand.u32 %v17, 4294901760
  %424 = vmatpush.msra.mxu0 %v423
  %v425 = vand.u32 %v13, 4294901760
  %426 = vmatpush.msra.mxu0 %v425
  %v427 = vand.u32 %v34, 4294901760
  %428 = vmatmul.f32.gmra.mxu0 %v427
  %v429 = vpop.f32.mrf.mxu0
  %v430 = vadd.f32 %v404, %v429
  %431 = vdwg.mxu0
  %432 = vmatpush.msra.mxu0 0.0
  %433 = vmatpush.msra.mxu0 0.0
  %434 = vmatpush.msra.mxu0 0.0
  %435 = vmatpush.msra.mxu0 0.0
  %436 = vmatpush.msra.mxu0 0.0
  %437 = vmatpush.msra.mxu0 0.0
  %438 = vmatpush.msra.mxu0 0.0
  %439 = vmatpush.msra.mxu0 0.0
  %440 = vmatpush.msra.mxu0 0.0
  %441 = vmatpush.msra.mxu0 0.0
  %442 = vmatpush.msra.mxu0 0.0
  %v443 = vand.u32 %v30, 4294901760
  %444 = vmatpush.msra.mxu0 %v443
  %v445 = vand.u32 %v26, 4294901760
  %446 = vmatpush.msra.mxu0 %v445
  %v447 = vand.u32 %v22, 4294901760
  %448 = vmatpush.msra.mxu0 %v447
  %v449 = vand.u32 %v18, 4294901760
  %450 = vmatpush.msra.mxu0 %v449
  %v451 = vand.u32 %v14, 4294901760
  %452 = vmatpush.msra.mxu0 %v451
  %v453 = vand.u32 %v34, 4294901760
  %v454 = vsub.f32 %v34, %v453
  %v455 = vand.u32 %v454, 4294901760
  %v456 = vsub.f32 %v454, %v455
  %v457 = vand.u32 %v456, 4294901760
  %458 = vmatmul.f32.gmra.mxu0 %v457
  %v459 = vpop.f32.mrf.mxu0
  %v460 = vadd.f32 0.0, %v459
  %461 = vdwg.mxu0
  %462 = vmatpush.msra.mxu0 0.0
  %463 = vmatpush.msra.mxu0 0.0
  %464 = vmatpush.msra.mxu0 0.0
  %465 = vmatpush.msra.mxu0 0.0
  %466 = vmatpush.msra.mxu0 0.0
  %467 = vmatpush.msra.mxu0 0.0
  %468 = vmatpush.msra.mxu0 0.0
  %469 = vmatpush.msra.mxu0 0.0
  %470 = vmatpush.msra.mxu0 0.0
  %471 = vmatpush.msra.mxu0 0.0
  %472 = vmatpush.msra.mxu0 0.0
  %v473 = vand.u32 %v30, 4294901760
  %v474 = vsub.f32 %v30, %v473
  %v475 = vand.u32 %v474, 4294901760
  %v476 = vsub.f32 %v474, %v475
  %v477 = vand.u32 %v476, 4294901760
  %478 = vmatpush.msra.mxu0 %v477
  %v479 = vand.u32 %v26, 4294901760
  %v480 = vsub.f32 %v26, %v479
  %v481 = vand.u32 %v480, 4294901760
  %v482 = vsub.f32 %v480, %v481
  %v483 = vand.u32 %v482, 4294901760
  %484 = vmatpush.msra.mxu0 %v483
  %v485 = vand.u32 %v22, 4294901760
  %v486 = vsub.f32 %v22, %v485
  %v487 = vand.u32 %v486, 4294901760
  %v488 = vsub.f32 %v486, %v487
  %v489 = vand.u32 %v488, 4294901760
  %490 = vmatpush.msra.mxu0 %v489
  %v491 = vand.u32 %v18, 4294901760
  %v492 = vsub.f32 %v18, %v491
  %v493 = vand.u32 %v492, 4294901760
  %v494 = vsub.f32 %v492, %v493
  %v495 = vand.u32 %v494, 4294901760
  %496 = vmatpush.msra.mxu0 %v495
  %v497 = vand.u32 %v14, 4294901760
  %v498 = vsub.f32 %v14, %v497
  %v499 = vand.u32 %v498, 4294901760
  %v500 = vsub.f32 %v498, %v499
  %v501 = vand.u32 %v500, 4294901760
  %502 = vmatpush.msra.mxu0 %v501
  %v503 = vand.u32 %v34, 4294901760
  %504 = vmatmul.f32.gmra.mxu0 %v503
  %v505 = vpop.f32.mrf.mxu0
  %v506 = vadd.f32 %v460, %v505
  %507 = vdwg.mxu0
  %508 = vmatpush.msra.mxu0 0.0
  %509 = vmatpush.msra.mxu0 0.0
  %510 = vmatpush.msra.mxu0 0.0
  %511 = vmatpush.msra.mxu0 0.0
  %512 = vmatpush.msra.mxu0 0.0
  %513 = vmatpush.msra.mxu0 0.0
  %514 = vmatpush.msra.mxu0 0.0
  %515 = vmatpush.msra.mxu0 0.0
  %516 = vmatpush.msra.mxu0 0.0
  %517 = vmatpush.msra.mxu0 0.0
  %518 = vmatpush.msra.mxu0 0.0
  %v519 = vand.u32 %v30, 4294901760
  %v520 = vsub.f32 %v30, %v519
  %521 = vmatpush.msra.mxu0 %v520
  %v522 = vand.u32 %v26, 4294901760
  %v523 = vsub.f32 %v26, %v522
  %524 = vmatpush.msra.mxu0 %v523
  %v525 = vand.u32 %v22, 4294901760
  %v526 = vsub.f32 %v22, %v525
  %527 = vmatpush.msra.mxu0 %v526
  %v528 = vand.u32 %v18, 4294901760
  %v529 = vsub.f32 %v18, %v528
  %530 = vmatpush.msra.mxu0 %v529
  %v531 = vand.u32 %v14, 4294901760
  %v532 = vsub.f32 %v14, %v531
  %533 = vmatpush.msra.mxu0 %v532
  %v534 = vand.u32 %v34, 4294901760
  %v535 = vsub.f32 %v34, %v534
  %536 = vmatmul.f32.gmra.mxu0 %v535
  %v537 = vpop.f32.mrf.mxu0
  %v538 = vadd.f32 %v506, %v537
  %539 = vdwg.mxu0
  %540 = vmatpush.msra.mxu0 0.0
  %541 = vmatpush.msra.mxu0 0.0
  %542 = vmatpush.msra.mxu0 0.0
  %543 = vmatpush.msra.mxu0 0.0
  %544 = vmatpush.msra.mxu0 0.0
  %545 = vmatpush.msra.mxu0 0.0
  %546 = vmatpush.msra.mxu0 0.0
  %547 = vmatpush.msra.mxu0 0.0
  %548 = vmatpush.msra.mxu0 0.0
  %549 = vmatpush.msra.mxu0 0.0
  %550 = vmatpush.msra.mxu0 0.0
  %v551 = vand.u32 %v30, 4294901760
  %552 = vmatpush.msra.mxu0 %v551
  %v553 = vand.u32 %v26, 4294901760
  %554 = vmatpush.msra.mxu0 %v553
  %v555 = vand.u32 %v22, 4294901760
  %556 = vmatpush.msra.mxu0 %v555
  %v557 = vand.u32 %v18, 4294901760
  %558 = vmatpush.msra.mxu0 %v557
  %v559 = vand.u32 %v14, 4294901760
  %560 = vmatpush.msra.mxu0 %v559
  %v561 = vand.u32 %v34, 4294901760
  %v562 = vsub.f32 %v34, %v561
  %v563 = vand.u32 %v562, 4294901760
  %564 = vmatmul.f32.gmra.mxu0 %v563
  %v565 = vpop.f32.mrf.mxu0
  %v566 = vadd.f32 %v538, %v565
  %567 = vdwg.mxu0
  %568 = vmatpush.msra.mxu0 0.0
  %569 = vmatpush.msra.mxu0 0.0
  %570 = vmatpush.msra.mxu0 0.0
  %571 = vmatpush.msra.mxu0 0.0
  %572 = vmatpush.msra.mxu0 0.0
  %573 = vmatpush.msra.mxu0 0.0
  %574 = vmatpush.msra.mxu0 0.0
  %575 = vmatpush.msra.mxu0 0.0
  %576 = vmatpush.msra.mxu0 0.0
  %577 = vmatpush.msra.mxu0 0.0
  %578 = vmatpush.msra.mxu0 0.0
  %v579 = vand.u32 %v30, 4294901760
  %v580 = vsub.f32 %v30, %v579
  %v581 = vand.u32 %v580, 4294901760
  %582 = vmatpush.msra.mxu0 %v581
  %v583 = vand.u32 %v26, 4294901760
  %v584 = vsub.f32 %v26, %v583
  %v585 = vand.u32 %v584, 4294901760
  %586 = vmatpush.msra.mxu0 %v585
  %v587 = vand.u32 %v22, 4294901760
  %v588 = vsub.f32 %v22, %v587
  %v589 = vand.u32 %v588, 4294901760
  %590 = vmatpush.msra.mxu0 %v589
  %v591 = vand.u32 %v18, 4294901760
  %v592 = vsub.f32 %v18, %v591
  %v593 = vand.u32 %v592, 4294901760
  %594 = vmatpush.msra.mxu0 %v593
  %v595 = vand.u32 %v14, 4294901760
  %v596 = vsub.f32 %v14, %v595
  %v597 = vand.u32 %v596, 4294901760
  %598 = vmatpush.msra.mxu0 %v597
  %v599 = vand.u32 %v34, 4294901760
  %600 = vmatmul.f32.gmra.mxu0 %v599
  %v601 = vpop.f32.mrf.mxu0
  %v602 = vadd.f32 %v566, %v601
  %603 = vdwg.mxu0
  %604 = vmatpush.msra.mxu0 0.0
  %605 = vmatpush.msra.mxu0 0.0
  %606 = vmatpush.msra.mxu0 0.0
  %607 = vmatpush.msra.mxu0 0.0
  %608 = vmatpush.msra.mxu0 0.0
  %609 = vmatpush.msra.mxu0 0.0
  %610 = vmatpush.msra.mxu0 0.0
  %611 = vmatpush.msra.mxu0 0.0
  %612 = vmatpush.msra.mxu0 0.0
  %613 = vmatpush.msra.mxu0 0.0
  %614 = vmatpush.msra.mxu0 0.0
  %v615 = vand.u32 %v30, 4294901760
  %616 = vmatpush.msra.mxu0 %v615
  %v617 = vand.u32 %v26, 4294901760
  %618 = vmatpush.msra.mxu0 %v617
  %v619 = vand.u32 %v22, 4294901760
  %620 = vmatpush.msra.mxu0 %v619
  %v621 = vand.u32 %v18, 4294901760
  %622 = vmatpush.msra.mxu0 %v621
  %v623 = vand.u32 %v14, 4294901760
  %624 = vmatpush.msra.mxu0 %v623
  %v625 = vand.u32 %v34, 4294901760
  %626 = vmatmul.f32.gmra.mxu0 %v625
  %v627 = vpop.f32.mrf.mxu0
  %v628 = vadd.f32 %v602, %v627
  %629 = vdwg.mxu0
  %630 = vmatpush.msra.mxu0 0.0
  %631 = vmatpush.msra.mxu0 0.0
  %632 = vmatpush.msra.mxu0 0.0
  %633 = vmatpush.msra.mxu0 0.0
  %634 = vmatpush.msra.mxu0 0.0
  %635 = vmatpush.msra.mxu0 0.0
  %636 = vmatpush.msra.mxu0 0.0
  %637 = vmatpush.msra.mxu0 0.0
  %638 = vmatpush.msra.mxu0 0.0
  %639 = vmatpush.msra.mxu0 0.0
  %640 = vmatpush.msra.mxu0 0.0
  %v641 = vand.u32 %v31, 4294901760
  %642 = vmatpush.msra.mxu0 %v641
  %v643 = vand.u32 %v27, 4294901760
  %644 = vmatpush.msra.mxu0 %v643
  %v645 = vand.u32 %v23, 4294901760
  %646 = vmatpush.msra.mxu0 %v645
  %v647 = vand.u32 %v19, 4294901760
  %648 = vmatpush.msra.mxu0 %v647
  %v649 = vand.u32 %v15, 4294901760
  %650 = vmatpush.msra.mxu0 %v649
  %v651 = vand.u32 %v34, 4294901760
  %v652 = vsub.f32 %v34, %v651
  %v653 = vand.u32 %v652, 4294901760
  %v654 = vsub.f32 %v652, %v653
  %v655 = vand.u32 %v654, 4294901760
  %656 = vmatmul.f32.gmra.mxu0 %v655
  %v657 = vpop.f32.mrf.mxu0
  %v658 = vadd.f32 0.0, %v657
  %659 = vdwg.mxu0
  %660 = vmatpush.msra.mxu0 0.0
  %661 = vmatpush.msra.mxu0 0.0
  %662 = vmatpush.msra.mxu0 0.0
  %663 = vmatpush.msra.mxu0 0.0
  %664 = vmatpush.msra.mxu0 0.0
  %665 = vmatpush.msra.mxu0 0.0
  %666 = vmatpush.msra.mxu0 0.0
  %667 = vmatpush.msra.mxu0 0.0
  %668 = vmatpush.msra.mxu0 0.0
  %669 = vmatpush.msra.mxu0 0.0
  %670 = vmatpush.msra.mxu0 0.0
  %v671 = vand.u32 %v31, 4294901760
  %v672 = vsub.f32 %v31, %v671
  %v673 = vand.u32 %v672, 4294901760
  %v674 = vsub.f32 %v672, %v673
  %v675 = vand.u32 %v674, 4294901760
  %676 = vmatpush.msra.mxu0 %v675
  %v677 = vand.u32 %v27, 4294901760
  %v678 = vsub.f32 %v27, %v677
  %v679 = vand.u32 %v678, 4294901760
  %v680 = vsub.f32 %v678, %v679
  %v681 = vand.u32 %v680, 4294901760
  %682 = vmatpush.msra.mxu0 %v681
  %v683 = vand.u32 %v23, 4294901760
  %v684 = vsub.f32 %v23, %v683
  %v685 = vand.u32 %v684, 4294901760
  %v686 = vsub.f32 %v684, %v685
  %v687 = vand.u32 %v686, 4294901760
  %688 = vmatpush.msra.mxu0 %v687
  %v689 = vand.u32 %v19, 4294901760
  %v690 = vsub.f32 %v19, %v689
  %v691 = vand.u32 %v690, 4294901760
  %v692 = vsub.f32 %v690, %v691
  %v693 = vand.u32 %v692, 4294901760
  %694 = vmatpush.msra.mxu0 %v693
  %v695 = vand.u32 %v15, 4294901760
  %v696 = vsub.f32 %v15, %v695
  %v697 = vand.u32 %v696, 4294901760
  %v698 = vsub.f32 %v696, %v697
  %v699 = vand.u32 %v698, 4294901760
  %700 = vmatpush.msra.mxu0 %v699
  %v701 = vand.u32 %v34, 4294901760
  %702 = vmatmul.f32.gmra.mxu0 %v701
  %v703 = vpop.f32.mrf.mxu0
  %v704 = vadd.f32 %v658, %v703
  %705 = vdwg.mxu0
  %706 = vmatpush.msra.mxu0 0.0
  %707 = vmatpush.msra.mxu0 0.0
  %708 = vmatpush.msra.mxu0 0.0
  %709 = vmatpush.msra.mxu0 0.0
  %710 = vmatpush.msra.mxu0 0.0
  %711 = vmatpush.msra.mxu0 0.0
  %712 = vmatpush.msra.mxu0 0.0
  %713 = vmatpush.msra.mxu0 0.0
  %714 = vmatpush.msra.mxu0 0.0
  %715 = vmatpush.msra.mxu0 0.0
  %716 = vmatpush.msra.mxu0 0.0
  %v717 = vand.u32 %v31, 4294901760
  %v718 = vsub.f32 %v31, %v717
  %719 = vmatpush.msra.mxu0 %v718
  %v720 = vand.u32 %v27, 4294901760
  %v721 = vsub.f32 %v27, %v720
  %722 = vmatpush.msra.mxu0 %v721
  %v723 = vand.u32 %v23, 4294901760
  %v724 = vsub.f32 %v23, %v723
  %725 = vmatpush.msra.mxu0 %v724
  %v726 = vand.u32 %v19, 4294901760
  %v727 = vsub.f32 %v19, %v726
  %728 = vmatpush.msra.mxu0 %v727
  %v729 = vand.u32 %v15, 4294901760
  %v730 = vsub.f32 %v15, %v729
  %731 = vmatpush.msra.mxu0 %v730
  %v732 = vand.u32 %v34, 4294901760
  %v733 = vsub.f32 %v34, %v732
  %734 = vmatmul.f32.gmra.mxu0 %v733
  %v735 = vpop.f32.mrf.mxu0
  %v736 = vadd.f32 %v704, %v735
  %737 = vdwg.mxu0
  %738 = vmatpush.msra.mxu0 0.0
  %739 = vmatpush.msra.mxu0 0.0
  %740 = vmatpush.msra.mxu0 0.0
  %741 = vmatpush.msra.mxu0 0.0
  %742 = vmatpush.msra.mxu0 0.0
  %743 = vmatpush.msra.mxu0 0.0
  %744 = vmatpush.msra.mxu0 0.0
  %745 = vmatpush.msra.mxu0 0.0
  %746 = vmatpush.msra.mxu0 0.0
  %747 = vmatpush.msra.mxu0 0.0
  %748 = vmatpush.msra.mxu0 0.0
  %v749 = vand.u32 %v31, 4294901760
  %750 = vmatpush.msra.mxu0 %v749
  %v751 = vand.u32 %v27, 4294901760
  %752 = vmatpush.msra.mxu0 %v751
  %v753 = vand.u32 %v23, 4294901760
  %754 = vmatpush.msra.mxu0 %v753
  %v755 = vand.u32 %v19, 4294901760
  %756 = vmatpush.msra.mxu0 %v755
  %v757 = vand.u32 %v15, 4294901760
  %758 = vmatpush.msra.mxu0 %v757
  %v759 = vand.u32 %v34, 4294901760
  %v760 = vsub.f32 %v34, %v759
  %v761 = vand.u32 %v760, 4294901760
  %762 = vmatmul.f32.gmra.mxu0 %v761
  %v763 = vpop.f32.mrf.mxu0
  %v764 = vadd.f32 %v736, %v763
  %765 = vdwg.mxu0
  %766 = vmatpush.msra.mxu0 0.0
  %767 = vmatpush.msra.mxu0 0.0
  %768 = vmatpush.msra.mxu0 0.0
  %769 = vmatpush.msra.mxu0 0.0
  %770 = vmatpush.msra.mxu0 0.0
  %771 = vmatpush.msra.mxu0 0.0
  %772 = vmatpush.msra.mxu0 0.0
  %773 = vmatpush.msra.mxu0 0.0
  %774 = vmatpush.msra.mxu0 0.0
  %775 = vmatpush.msra.mxu0 0.0
  %776 = vmatpush.msra.mxu0 0.0
  %v777 = vand.u32 %v31, 4294901760
  %v778 = vsub.f32 %v31, %v777
  %v779 = vand.u32 %v778, 4294901760
  %780 = vmatpush.msra.mxu0 %v779
  %v781 = vand.u32 %v27, 4294901760
  %v782 = vsub.f32 %v27, %v781
  %v783 = vand.u32 %v782, 4294901760
  %784 = vmatpush.msra.mxu0 %v783
  %v785 = vand.u32 %v23, 4294901760
  %v786 = vsub.f32 %v23, %v785
  %v787 = vand.u32 %v786, 4294901760
  %788 = vmatpush.msra.mxu0 %v787
  %v789 = vand.u32 %v19, 4294901760
  %v790 = vsub.f32 %v19, %v789
  %v791 = vand.u32 %v790, 4294901760
  %792 = vmatpush.msra.mxu0 %v791
  %v793 = vand.u32 %v15, 4294901760
  %v794 = vsub.f32 %v15, %v793
  %v795 = vand.u32 %v794, 4294901760
  %796 = vmatpush.msra.mxu0 %v795
  %v797 = vand.u32 %v34, 4294901760
  %798 = vmatmul.f32.gmra.mxu0 %v797
  %v799 = vpop.f32.mrf.mxu0
  %v800 = vadd.f32 %v764, %v799
  %801 = vdwg.mxu0
  %802 = vmatpush.msra.mxu0 0.0
  %803 = vmatpush.msra.mxu0 0.0
  %804 = vmatpush.msra.mxu0 0.0
  %805 = vmatpush.msra.mxu0 0.0
  %806 = vmatpush.msra.mxu0 0.0
  %807 = vmatpush.msra.mxu0 0.0
  %808 = vmatpush.msra.mxu0 0.0
  %809 = vmatpush.msra.mxu0 0.0
  %810 = vmatpush.msra.mxu0 0.0
  %811 = vmatpush.msra.mxu0 0.0
  %812 = vmatpush.msra.mxu0 0.0
  %v813 = vand.u32 %v31, 4294901760
  %814 = vmatpush.msra.mxu0 %v813
  %v815 = vand.u32 %v27, 4294901760
  %816 = vmatpush.msra.mxu0 %v815
  %v817 = vand.u32 %v23, 4294901760
  %818 = vmatpush.msra.mxu0 %v817
  %v819 = vand.u32 %v19, 4294901760
  %820 = vmatpush.msra.mxu0 %v819
  %v821 = vand.u32 %v15, 4294901760
  %822 = vmatpush.msra.mxu0 %v821
  %v823 = vand.u32 %v34, 4294901760
  %824 = vmatmul.f32.gmra.mxu0 %v823
  %v825 = vpop.f32.mrf.mxu0
  %v826 = vadd.f32 %v800, %v825
  %827 = vdwg.mxu0
  %828 = vst [vmem:[%s2] sm:$0xff] %v232
  %829 = vst [vmem:[%s2 + $0x8] sm:$0xff] %v430
  %830 = vst [vmem:[%s2 + $0x10] sm:$0xff] %v628
  %831 = vst [vmem:[%s2 + $0x18] sm:$0xff] %v826
  // Predicated region
  $region10: #{conv2d_pallas.1} parent=0 // pred_check
    _
  $region11: #{conv2d_pallas.1} parent=0 // pred_check_branch
    %833 = sbr.rel (0) target = $region13
  $region12: #{conv2d_pallas.1} parent=0 // pred_region
    _
  $region13: #{conv2d_pallas.1} parent=0 // pred_fallthru
    _
  // Predicated region
  $region14: #{conv2d_pallas.1} parent=0 // pred_check
    _
  $region15: #{conv2d_pallas.1} parent=0 // pred_check_branch
    %835 = sbr.rel (0) target = $region17
  $region16: #{conv2d_pallas.1} parent=0 // pred_region
    _
  $region17: #{conv2d_pallas.1} parent=0 // pred_fallthru
    _

</llo_original>
